<compile_context>
chip_gen: v5e
topology: v5e:2x2
jax: 0.10.0
libtpu: 0.0.40
codegen_flags: <defaults>
</compile_context>

<pallas_src>
import jax
import jax.numpy as jnp
from jax.experimental import pallas as pl
from jax.experimental.pallas import tpu as pltpu

SIGMA = 10.0
RHO = 28.0
BETA = 8.0 / 3.0


def _round_up(x, m):
    return (x + m - 1) // m * m


def _lorenz_kernel(y_ref, o_ref):
    # y_ref / o_ref: (3, TB) block.  Batch is on the lane axis (lane-dense),
    # the 3 state components are sublane rows -> cheap full-row reads/writes.
    y1 = y_ref[0:1, :]
    y2 = y_ref[1:2, :]
    y3 = y_ref[2:3, :]
    # Direct per-row stores: no concatenate, no masked lane-partial stores.
    o_ref[0:1, :] = SIGMA * (y2 - y1)
    o_ref[1:2, :] = y1 * (RHO - y3) - y2
    o_ref[2:3, :] = y1 * y2 - BETA * y3


def lorenz3d_forward_soa(y_soa, *, tile_b=65536):
    """Lorenz derivative on a (3, B) structure-of-arrays state.

    Keeping the ODE state in this layout across integration steps makes the
    transpose in `lorenz3d_forward` unnecessary.
    """
    D, B = y_soa.shape
    assert D == 3, "Lorenz3D expects state dimension 3"
    # Lane-multiple tile; small batches collapse to a single 128-wide block.
    TB = min(tile_b, _round_up(max(B, 1), 128))
    Bp = _round_up(B, TB)
    if Bp != B:
        y_soa = jnp.pad(y_soa, ((0, 0), (0, Bp - B)))

    out = pl.pallas_call(
        _lorenz_kernel,
        out_shape=jax.ShapeDtypeStruct((3, Bp), y_soa.dtype),
        grid=(Bp // TB,),
        in_specs=[pl.BlockSpec((3, TB), lambda i: (0, i))],
        out_specs=pl.BlockSpec((3, TB), lambda i: (0, i)),
        compiler_params=pltpu.CompilerParams(
            dimension_semantics=("parallel",)),
        cost_estimate=pl.CostEstimate(
            flops=9 * Bp,
            transcendentals=0,
            bytes_accessed=2 * 3 * 4 * Bp),
    )(y_soa)
    return out[:, :B]


def lorenz3d_forward(t, y):
    """Pallas equivalent of Lorenz3D.forward(t, y): (B, 3) -> (B, 3).

    `t` is accepted for API parity with the PyTorch module but is unused,
    exactly as in the reference implementation.
    """
    del t  # unused, same as reference
    B, D = y.shape
    assert D == 3, "Lorenz3D expects state dimension 3"
    # TODO(synk): for a real ODE integrator, fuse the whole RK step (all f(y)
    # evaluations + state update) into one kernel and keep the state in (3, B)
    # layout so these transposes and the per-eval HBM round trip disappear.
    return lorenz3d_forward_soa(y.T).T


def lorenz3d_reference(t, y):
    """Pure-JAX reference for correctness checking."""
    del t
    y1, y2, y3 = y[:, 0], y[:, 1], y[:, 2]
    return jnp.stack(
        [SIGMA * (y2 - y1), y1 * (RHO - y3) - y2, y1 * y2 - BETA * y3], axis=1
    )


if __name__ == "__main__":
    t = jnp.float32(0.0)

    # Small shape matching the module's (B, 3) state.
    y_small = jax.random.normal(jax.random.PRNGKey(0), (8, 3), dtype=jnp.float32)
    out_small = jax.block_until_ready(lorenz3d_forward(t, y_small))
    ref_small = lorenz3d_reference(t, y_small)
    assert out_small.shape == (8, 3)
    assert out_small.dtype == jnp.float32
    assert jnp.allclose(out_small, ref_small, atol=1e-5, rtol=1e-5)

    # Non-multiple-of-128 batch: exercises padding path.
    y_med = jax.random.normal(jax.random.PRNGKey(1), (300, 3), dtype=jnp.float32)
    out_med = jax.block_until_ready(lorenz3d_forward(t, y_med))
    assert jnp.allclose(out_med, lorenz3d_reference(t, y_med), atol=1e-5, rtol=1e-5)

    # Force a multi-block grid (tile_b=128 -> grid of 3) via the SoA entry point.
    out_grid = jax.block_until_ready(
        lorenz3d_forward_soa(y_med.T, tile_b=128)).T
    assert jnp.allclose(out_grid, lorenz3d_reference(t, y_med), atol=1e-5, rtol=1e-5)

    print("KERNEL_OK")
</pallas_src>

<mosaic_0001>
module attributes {stable_mosaic.version = 11 : i64} {
  func.func @_lorenz_kernel(%arg0: i32, %arg1: memref<3x128xf32, #tpu.memory_space<vmem>>, %arg2: memref<3x128xf32, #tpu.memory_space<vmem>>) attributes {dimension_semantics = [#tpu.dimension_semantics<parallel>], iteration_bounds = array<i64: 1>, scalar_prefetch = 0 : i64, scratch_operands = 0 : i64, tpu.core_type = #tpu.core_type<tc>, window_params = [{transform_indices = @transform_0, window_bounds = array<i64: 3, 128>}, {transform_indices = @transform_1, window_bounds = array<i64: 3, 128>}]} {
    %c0 = arith.constant 0 : index
    %c0_0 = arith.constant 0 : index
    %0 = vector.load %arg1[%c0, %c0_0] : memref<3x128xf32, #tpu.memory_space<vmem>>, vector<1x128xf32>
    %c1 = arith.constant 1 : index
    %c0_1 = arith.constant 0 : index
    %1 = vector.load %arg1[%c1, %c0_1] : memref<3x128xf32, #tpu.memory_space<vmem>>, vector<1x128xf32>
    %c2 = arith.constant 2 : index
    %c0_2 = arith.constant 0 : index
    %2 = vector.load %arg1[%c2, %c0_2] : memref<3x128xf32, #tpu.memory_space<vmem>>, vector<1x128xf32>
    %3 = arith.subf %1, %0 : vector<1x128xf32>
    %cst = arith.constant 1.000000e+01 : f32
    %4 = vector.broadcast %cst : f32 to vector<1x128xf32>
    %5 = arith.mulf %4, %3 : vector<1x128xf32>
    %c0_3 = arith.constant 0 : index
    %c0_4 = arith.constant 0 : index
    %6 = vector.load %arg2[%c0_3, %c0_4] : memref<3x128xf32, #tpu.memory_space<vmem>>, vector<1x128xf32>
    tpu.vector_store %arg2[%c0_3, %c0_4], %5 {strides = array<i32>} : memref<3x128xf32, #tpu.memory_space<vmem>>, vector<1x128xf32>,
    %cst_5 = arith.constant 2.800000e+01 : f32
    %7 = vector.broadcast %cst_5 : f32 to vector<1x128xf32>
    %8 = arith.subf %7, %2 : vector<1x128xf32>
    %9 = arith.mulf %0, %8 : vector<1x128xf32>
    %10 = arith.subf %9, %1 : vector<1x128xf32>
    %c1_6 = arith.constant 1 : index
    %c0_7 = arith.constant 0 : index
    %11 = vector.load %arg2[%c1_6, %c0_7] : memref<3x128xf32, #tpu.memory_space<vmem>>, vector<1x128xf32>
    tpu.vector_store %arg2[%c1_6, %c0_7], %10 {strides = array<i32>} : memref<3x128xf32, #tpu.memory_space<vmem>>, vector<1x128xf32>,
    %12 = arith.mulf %0, %1 : vector<1x128xf32>
    %cst_8 = arith.constant 2.66666675 : f32
    %13 = vector.broadcast %cst_8 : f32 to vector<1x128xf32>
    %14 = arith.mulf %13, %2 : vector<1x128xf32>
    %15 = arith.subf %12, %14 : vector<1x128xf32>
    %c2_9 = arith.constant 2 : index
    %c0_10 = arith.constant 0 : index
    %16 = vector.load %arg2[%c2_9, %c0_10] : memref<3x128xf32, #tpu.memory_space<vmem>>, vector<1x128xf32>
    tpu.vector_store %arg2[%c2_9, %c0_10], %15 {strides = array<i32>} : memref<3x128xf32, #tpu.memory_space<vmem>>, vector<1x128xf32>,
    return
  }
  func.func @transform_0(%arg0: i32) -> (i32, i32) {
    %c0_i32 = arith.constant 0 : i32
    %c0_i32_0 = arith.constant 0 : i32
    return %c0_i32, %arg0 : i32, i32
  }
  func.func @transform_1(%arg0: i32) -> (i32, i32) {
    %c0_i32 = arith.constant 0 : i32
    %c0_i32_0 = arith.constant 0 : i32
    return %c0_i32, %arg0 : i32, i32
  }
}

</mosaic_0001>

<llo_original>
// kernel: tpu_custom_call.1
$region0: #{tpu_custom_call.1}
  #allocation0 [shape = 'u32[]', space=smem, size = 0x4, offset = 0x4, fixed_abs, tag = 'smem constant byte address 0x4 - core index']
  #allocation1 [shape = 'u32[72,128]{1,0:T(1,128)}', space=vmem, size = 0x9000, scoped, tag = 'internal scratch']
  %s0 = inlined_call_operand.hbm [shape: f32[3,128], index: 0, kind: input, shape index: {}]
  %s1 = inlined_call_operand.hbm [shape: f32[3,128], index: 1, kind: output, shape index: {}]
  %s2 = sld [smem:[#allocation0]]
  $region18: #{tpu_custom_call.1} parent=0
    _
  %s4 = ssub.s32 1, %s2
  %s5 = scalar_select 0, %s4, %s2
  $region1: #{tpu_custom_call.1} parent=0
    #allocation2 [shape = 'u8[2048]{0}', space=vmem, size = 0x800, scoped, tag = 'input window, operand 0, single buffered']
    #allocation3 [shape = 's32[1]{0}', space=sflag, size = 0x4, scoped, tag = 'scoped memory for tpu_custom_call.1']
    #allocation4 [shape = 's32[1]{0}', space=sflag, size = 0x4, scoped, tag = 'scoped memory for tpu_custom_call.1']
    #allocation5 [shape = 'u8[2048]{0}', space=vmem, size = 0x800, scoped, tag = 'output window, operand 0, single buffered']
    %6 = vsyncpa [#allocation3], 0
    %7 = vsyncpa [#allocation4], 0
    // Predicated region
    $region2: #{tpu_custom_call.1} parent=1 // pred_check
      _
    $region3: #{tpu_custom_call.1} parent=1 // pred_check_branch
      %9 = sbr.rel (0) target = $region5
    $region4: #{tpu_custom_call.1} parent=1 // pred_region
      %11 = vsyncadd [#allocation3], 0
      %s13 = sshll.u32 %s0, 4
      %s14 = int_to_ptr.hbm [resolvable:$true] %s13
      %s15 = sshll.u32 [#allocation2], 4
      %s16 = int_to_ptr.vmem [resolvable:$true] %s15
      %18 = dma.hbm_to_vmem [thread:$0]  %s14, 64, %s16, [#allocation3]
    $region5: #{tpu_custom_call.1} parent=1 // pred_fallthru
      _
    // Predicated region
    $region6: #{tpu_custom_call.1} parent=1 // pred_check
      _
    $region7: #{tpu_custom_call.1} parent=1 // pred_check_branch
      %20 = sbr.rel (0) target = $region9
    $region8: #{tpu_custom_call.1} parent=1 // pred_region
      %22 = dma.done [#allocation3], 64
    $region9: #{tpu_custom_call.1} parent=1 // pred_fallthru
      _
    %v23 = vld [vmem:[#allocation2] sm:$0x1]
    %v24 = vld [vmem:[#allocation2 + $0x1] sm:$0x1]
    %v25 = vld [vmem:[#allocation2 + $0x2] sm:$0x1]
    %v26 = vsub.f32 %v24, %v23
    %v27 = vmul.f32 %v26, 10.0
    %28 = vst [vmem:[#allocation5] sm:$0x1] %v27
    %v29 = vsub.f32 28.0, %v25
    %v30 = vmul.f32 %v23, %v29
    %v31 = vsub.f32 %v30, %v24
    %32 = vst [vmem:[#allocation5 + $0x1] sm:$0x1] %v31
    %v33 = vmul.f32 %v23, %v24
    %v34 = vmul.f32 %v25, 2.6666667
    %v35 = vsub.f32 %v33, %v34
    %36 = vst [vmem:[#allocation5 + $0x2] sm:$0x1] %v35
    // Predicated region
    $region10: #{tpu_custom_call.1} parent=1 // pred_check
      _
    $region11: #{tpu_custom_call.1} parent=1 // pred_check_branch
      %38 = sbr.rel (0) target = $region13
    $region12: #{tpu_custom_call.1} parent=1 // pred_region
      %40 = vsyncadd [#allocation4], 0
      %s42 = sshll.u32 [#allocation5], 4
      %s43 = int_to_ptr.vmem [resolvable:$true] %s42
      %s44 = sshll.u32 %s1, 4
      %s45 = int_to_ptr.hbm [resolvable:$true] %s44
      %47 = dma.vmem_to_hbm [thread:$0]  %s43, 64, %s45, [#allocation4]
    $region13: #{tpu_custom_call.1} parent=1 // pred_fallthru
      _
    // Predicated region
    $region14: #{tpu_custom_call.1} parent=1 // pred_check
      _
    $region15: #{tpu_custom_call.1} parent=1 // pred_check_branch
      %49 = sbr.rel (0) target = $region17
    $region16: #{tpu_custom_call.1} parent=1 // pred_region
      %51 = dma.done [#allocation4], 64
    $region17: #{tpu_custom_call.1} parent=1 // pred_fallthru
      _
    %52 = vsyncpa [#allocation3], 1
    %53 = vsyncpa [#allocation4], 1

</llo_original>
